<compile_context>
chip_gen: v7x
topology: tpu7x:2x2x1
jax: 0.10.0
libtpu: 0.0.40
codegen_flags: <defaults>
</compile_context>

<pallas_src>
import functools

import jax
import jax.numpy as jnp
from jax.experimental import pallas as pl
from jax.experimental.pallas import tpu as pltpu


# ---------------------------------------------------------------------------
# Model configuration (small, consistent with the module's forward pass).
# ---------------------------------------------------------------------------
BS = 2            # batch size
C = 3             # image channels
W = 16            # image width
H = 16            # image height
FRAMES = 8        # video frames
DIN = C * W * H   # 768 = 6*128 -> lane-dense rows
FEAT = 32         # image_encoder.img_feature_size
HID = FEAT // 2   # regression hidden size (F // 2)
NKPTS = 40        # keypoints -> keypoint head output = 40 * 2 = 80
KDIM = 2 * NKPTS
LN_EPS = 1e-5     # nn.LayerNorm default eps
NEG_SLOPE = 0.05  # module explicitly sets nn.LeakyReLU(negative_slope=0.05)

# Packed head-weight columns (lane axis of the fused (N, 128) output slab):
#   cols 0:80   keypoint head, cols 80:96 regression Linear-1, cols 96:128 zero pad.
PACK_COLS = 128
COL_H0 = KDIM

# Small parameters packed as sublane ROWS of one (8, 128) f32 slab.
ROW_BCAT = 0   # packed head bias (bkpt in cols 0:80, b1 in cols 80:96)
ROW_BENC = 1   # encoder bias      (cols 0:FEAT)
ROW_GAMMA = 2  # LayerNorm gamma   (cols 0:HID)
ROW_BETA = 3   # LayerNorm beta    (cols 0:HID)
ROW_W2 = 4     # Linear-2 weight   (cols 0:HID)
ROW_B2 = 5     # Linear-2 bias     (col 0)
SMALL_ROWS = 8


def _fused_kernel(bs, frames, x_ref, wenc_ref, wcat_ref, small_ref,
                  out_ref, ef_ref):
    """Fused CNN_Regressor forward, samples-as-rows / lane-dense orientation.

    x_ref:     (N, DIN)           N = bs*frames samples as rows, DIN on lanes
    wenc_ref:  (DIN, FEAT)        synthetic image-encoder weight
    wcat_ref:  (FEAT, PACK_COLS)  [keypoint head | regression Linear-1 | zero pad]
    small_ref: (8, PACK_COLS)     sublane-packed small parameters
    out_ref:   (N, PACK_COLS)     fused head output slab (lane-dense)
    ef_ref:    (bs, 1)            ejection fraction
    """
    small = small_ref[...]                               # (8, 128)
    bcat = small[ROW_BCAT:ROW_BCAT + 1, :]               # (1, 128)
    benc = small[ROW_BENC:ROW_BENC + 1, 0:FEAT]          # (1, FEAT)
    gamma = small[ROW_GAMMA:ROW_GAMMA + 1, 0:HID]        # (1, HID)
    beta = small[ROW_BETA:ROW_BETA + 1, 0:HID]           # (1, HID)
    w2 = small[ROW_W2:ROW_W2 + 1, 0:HID]                 # (1, HID)
    b2 = small[ROW_B2:ROW_B2 + 1, 0:1]                   # (1, 1)

    # --- synthetic image_encoder: Linear + ReLU over all bs*frames samples -----
    # TODO(synk): the real pretrained image_encoder / kpts_extractor CNNs are
    # external dependencies not defined in the module; modeled as linear heads.
    feat = jnp.dot(x_ref[...], wenc_ref[...],
                   preferred_element_type=jnp.float32)   # (N, FEAT)
    feat = jnp.maximum(feat + benc, 0.0)

    # --- keypoint head + regression Linear-1 fused into one MXU matmul ---------
    out = jnp.dot(feat, wcat_ref[...],
                  preferred_element_type=jnp.float32) + bcat   # (N, 128)
    out_ref[...] = out                                   # full-width, unmasked store

    # --- regression head: LayerNorm(HID) over lanes 80:96 ----------------------
    hcur = out[:, COL_H0:COL_H0 + HID]                   # (N, HID)
    mu = jnp.mean(hcur, axis=-1, keepdims=True)
    var = jnp.mean((hcur - mu) * (hcur - mu), axis=-1, keepdims=True)
    hn = (hcur - mu) * jax.lax.rsqrt(var + LN_EPS) * gamma + beta
    hl = jnp.where(hn >= 0.0, hn, NEG_SLOPE * hn)        # LeakyReLU(0.05)

    # Linear(HID -> 1) + Reduce(): sum over HID lanes and mean over this batch
    # element's frames.  (N, HID) -> (bs, frames, HID) is layout-preserving
    # (splits the major dim only); reductions are lane then sublane reduces.
    t = (hl * w2).reshape(bs, frames, HID)
    ssum = jnp.sum(jnp.sum(t, axis=2, keepdims=True), axis=1)      # (bs, 1)
    ef_pre = ssum * (1.0 / frames) + b2                            # (bs, 1)
    # Numerically stable Sigmoid.
    z = jnp.exp(-jnp.abs(ef_pre))
    ef_ref[...] = jnp.where(ef_pre >= 0.0, 1.0 / (1.0 + z), z / (1.0 + z))


def _vmem_spec():
    return pl.BlockSpec(memory_space=pltpu.MemorySpace.VMEM)


@jax.jit
def cnn_regressor_forward(x, params):
    """x: (bs, c, w, h, frames) float32 -> (kpts (bs, 40, 2, frames), ef (bs,))."""
    bs, c, w, h, frames = x.shape
    n = bs * frames
    din = c * w * h
    # PyTorch permute(0,4,1,2,3) + view: one tiny (48 KiB) upstream transpose,
    # producing a lane-dense (n, din) slab for the kernel.
    x2 = jnp.transpose(x, (0, 4, 1, 2, 3)).reshape(n, din)

    flops = 2 * n * din * FEAT + 2 * n * FEAT * PACK_COLS + 12 * n * HID
    bytes_accessed = 4 * (n * din + din * FEAT + FEAT * PACK_COLS
                          + SMALL_ROWS * PACK_COLS + n * PACK_COLS + bs)

    out_slab, ef2d = pl.pallas_call(
        functools.partial(_fused_kernel, bs, frames),
        out_shape=(
            jax.ShapeDtypeStruct((n, PACK_COLS), jnp.float32),
            jax.ShapeDtypeStruct((bs, 1), jnp.float32),
        ),
        in_specs=[_vmem_spec(), _vmem_spec(), _vmem_spec(), _vmem_spec()],
        out_specs=(_vmem_spec(), _vmem_spec()),
        cost_estimate=pl.CostEstimate(flops=flops, transcendentals=n + bs,
                                      bytes_accessed=bytes_accessed),
        # NOTE: at bs=2 the kernel is launch/DMA-latency bound; a grid +
        # dimension_semantics=("parallel",) megacore split (v7x) only pays off
        # at much larger batch, so no grid is used here.
    )(x2, params["wenc"], params["wcat"], params["small"])

    # kpts: (n, 80) -> (bs, frames, 40, 2) -> (bs, 40, 2, frames)  (tiny, in XLA).
    kpts = out_slab[:, 0:KDIM].reshape(bs, frames, NKPTS, 2).transpose(0, 2, 3, 1)
    ef = ef2d[:, 0]  # (bs,)
    return kpts, ef


def init_params(key):
    ks = jax.random.split(key, 8)

    def lin(k, fan_in, fan_out):  # weight stored (in, out) for samples-as-rows
        return (jax.random.normal(k, (fan_in, fan_out), jnp.float32)
                / jnp.sqrt(jnp.float32(fan_in)))

    wenc = lin(ks[0], DIN, FEAT)                           # (DIN, FEAT)
    benc = 0.01 * jax.random.normal(ks[1], (FEAT,), jnp.float32)
    wkpt = lin(ks[2], FEAT, KDIM)                          # (FEAT, KDIM)
    bkpt = 0.01 * jax.random.normal(ks[3], (KDIM,), jnp.float32)
    w1 = lin(ks[4], FEAT, HID)                             # (FEAT, HID)
    b1 = 0.01 * jax.random.normal(ks[5], (HID,), jnp.float32)
    gamma = jnp.ones((HID,), jnp.float32)                  # nn.LayerNorm defaults
    beta = jnp.zeros((HID,), jnp.float32)
    w2 = lin(ks[6], HID, 1)[:, 0]                          # (HID,)
    b2 = 0.01 * jax.random.normal(ks[7], (1,), jnp.float32)

    # Packed head weight: keypoint head next to regression Linear-1, zero padded.
    wcat = jnp.zeros((FEAT, PACK_COLS), jnp.float32)
    wcat = wcat.at[:, 0:KDIM].set(wkpt).at[:, COL_H0:COL_H0 + HID].set(w1)
    bcat = jnp.zeros((PACK_COLS,), jnp.float32)
    bcat = bcat.at[0:KDIM].set(bkpt).at[COL_H0:COL_H0 + HID].set(b1)

    def row(v):
        return jnp.zeros((PACK_COLS,), jnp.float32).at[:v.shape[0]].set(v)

    small = jnp.stack(
        [bcat, row(benc), row(gamma), row(beta), row(w2), row(b2),
         jnp.zeros((PACK_COLS,), jnp.float32),
         jnp.zeros((PACK_COLS,), jnp.float32)], axis=0)    # (8, 128)
    return {"wenc": wenc, "wcat": wcat, "small": small}


def _reference_forward(x, params):
    """Pure-JAX reference with identical semantics (validation only)."""
    bs, c, w, h, frames = x.shape
    hi = jax.lax.Precision.HIGHEST
    wenc = params["wenc"]
    wcat = params["wcat"]
    small = params["small"]
    bcat = small[ROW_BCAT, :]
    benc = small[ROW_BENC, 0:FEAT]
    gamma = small[ROW_GAMMA, 0:HID]
    beta = small[ROW_BETA, 0:HID]
    w2 = small[ROW_W2, 0:HID]
    b2 = small[ROW_B2, 0]

    xp = jnp.transpose(x, (0, 4, 1, 2, 3)).reshape(bs * frames, c * w * h)
    feat = jnp.maximum(jnp.dot(xp, wenc, precision=hi) + benc, 0.0)
    out = jnp.dot(feat, wcat, precision=hi) + bcat
    kpts = out[:, 0:KDIM].reshape(bs, frames, NKPTS, 2).transpose(0, 2, 3, 1)
    hcur = out[:, COL_H0:COL_H0 + HID]
    mu = jnp.mean(hcur, axis=-1, keepdims=True)
    var = jnp.mean((hcur - mu) ** 2, axis=-1, keepdims=True)
    hn = (hcur - mu) * jax.lax.rsqrt(var + LN_EPS) * gamma + beta
    hl = jnp.where(hn >= 0.0, hn, NEG_SLOPE * hn)
    s = jnp.dot(hl, w2, precision=hi) + b2                 # (bs*frames,)
    ef = jax.nn.sigmoid(jnp.mean(s.reshape(bs, frames), axis=1))
    return kpts, ef


if __name__ == "__main__":
    key = jax.random.PRNGKey(0)
    kx, kp = jax.random.split(key)
    x = jax.random.normal(kx, (BS, C, W, H, FRAMES), jnp.float32)
    params = init_params(kp)

    kpts, ef = cnn_regressor_forward(x, params)
    jax.block_until_ready((kpts, ef))

    assert kpts.shape == (BS, NKPTS, 2, FRAMES), kpts.shape
    assert ef.shape == (BS,), ef.shape
    assert bool(jnp.all(jnp.isfinite(kpts))) and bool(jnp.all(jnp.isfinite(ef)))
    assert bool(jnp.all((ef >= 0.0) & (ef <= 1.0)))  # sigmoid output range

    # Cross-check the fused kernel against a straightforward JAX reference.
    kpts_r, ef_r = _reference_forward(x, params)
    assert bool(jnp.allclose(kpts, kpts_r, atol=2e-3, rtol=2e-3)), "kpts mismatch"
    assert bool(jnp.allclose(ef, ef_r, atol=2e-3, rtol=2e-3)), "ef mismatch"

    print("KERNEL_OK")
</pallas_src>

<mosaic_0001>
module attributes {stable_mosaic.version = 11 : i64} {
  func.func @_fused_kernel(%arg0: memref<16x768xf32, #tpu.memory_space<vmem>>, %arg1: memref<768x32xf32, #tpu.memory_space<vmem>>, %arg2: memref<32x128xf32, #tpu.memory_space<vmem>>, %arg3: memref<8x128xf32, #tpu.memory_space<vmem>>, %arg4: memref<16x128xf32, #tpu.memory_space<vmem>>, %arg5: memref<2x1xf32, #tpu.memory_space<vmem>>) attributes {dimension_semantics = [], scalar_prefetch = 0 : i64, scratch_operands = 0 : i64, tpu.core_type = #tpu.core_type<tc>} {
    %c0 = arith.constant 0 : index
    %c0_0 = arith.constant 0 : index
    %0 = vector.load %arg3[%c0, %c0_0] : memref<8x128xf32, #tpu.memory_space<vmem>>, vector<8x128xf32>
    %1 = vector.extract_strided_slice %0 {offsets = [0, 0], sizes = [1, 128], strides = [1, 1]} : vector<8x128xf32> to vector<1x128xf32>
    %2 = vector.extract_strided_slice %0 {offsets = [1, 0], sizes = [1, 32], strides = [1, 1]} : vector<8x128xf32> to vector<1x32xf32>
    %3 = vector.extract_strided_slice %0 {offsets = [2, 0], sizes = [1, 16], strides = [1, 1]} : vector<8x128xf32> to vector<1x16xf32>
    %4 = vector.extract_strided_slice %0 {offsets = [3, 0], sizes = [1, 16], strides = [1, 1]} : vector<8x128xf32> to vector<1x16xf32>
    %5 = vector.extract_strided_slice %0 {offsets = [4, 0], sizes = [1, 16], strides = [1, 1]} : vector<8x128xf32> to vector<1x16xf32>
    %6 = vector.extract_strided_slice %0 {offsets = [5, 0], sizes = [1, 1], strides = [1, 1]} : vector<8x128xf32> to vector<1x1xf32>
    %c0_1 = arith.constant 0 : index
    %c0_2 = arith.constant 0 : index
    %7 = vector.load %arg0[%c0_1, %c0_2] : memref<16x768xf32, #tpu.memory_space<vmem>>, vector<16x768xf32>
    %c0_3 = arith.constant 0 : index
    %c0_4 = arith.constant 0 : index
    %8 = vector.load %arg1[%c0_3, %c0_4] : memref<768x32xf32, #tpu.memory_space<vmem>>, vector<768x32xf32>
    %cst = arith.constant dense<0.000000e+00> : vector<16x32xf32>
    %9 = tpu.matmul %7, %8, %cst {dimension_numbers = #tpu.dot_dimension_numbers<[1], [0], [0], [1], [0, 0, 1, 1], [], []>} : vector<16x768xf32>, vector<768x32xf32>, vector<16x32xf32> -> vector<16x32xf32>
    %10 = vector.broadcast %2 : vector<1x32xf32> to vector<16x32xf32>
    %11 = arith.addf %9, %10 : vector<16x32xf32>
    %cst_5 = arith.constant 0.000000e+00 : f32
    %12 = vector.broadcast %cst_5 : f32 to vector<16x32xf32>
    %13 = arith.maximumf %11, %12 : vector<16x32xf32>
    %c0_6 = arith.constant 0 : index
    %c0_7 = arith.constant 0 : index
    %14 = vector.load %arg2[%c0_6, %c0_7] : memref<32x128xf32, #tpu.memory_space<vmem>>, vector<32x128xf32>
    %cst_8 = arith.constant dense<0.000000e+00> : vector<16x128xf32>
    %15 = tpu.matmul %13, %14, %cst_8 {dimension_numbers = #tpu.dot_dimension_numbers<[1], [0], [0], [1], [0, 0, 1, 1], [], []>} : vector<16x32xf32>, vector<32x128xf32>, vector<16x128xf32> -> vector<16x128xf32>
    %16 = vector.broadcast %1 : vector<1x128xf32> to vector<16x128xf32>
    %17 = arith.addf %15, %16 : vector<16x128xf32>
    %c0_9 = arith.constant 0 : index
    %c0_10 = arith.constant 0 : index
    %18 = vector.load %arg4[%c0_9, %c0_10] : memref<16x128xf32, #tpu.memory_space<vmem>>, vector<16x128xf32>
    tpu.vector_store %arg4[%c0_9, %c0_10], %17 {strides = array<i32>} : memref<16x128xf32, #tpu.memory_space<vmem>>, vector<16x128xf32>,
    %19 = vector.extract_strided_slice %17 {offsets = [0, 80], sizes = [16, 16], strides = [1, 1]} : vector<16x128xf32> to vector<16x16xf32>
    %cst_11 = arith.constant dense<0.000000e+00> : vector<16xf32>
    %20 = vector.multi_reduction <add>, %19, %cst_11 [1] : vector<16x16xf32> to vector<16xf32>
    %21 = vector.shape_cast %20 : vector<16xf32> to vector<16x1xf32>
    %cst_12 = arith.constant 1.600000e+01 : f32
    %22 = vector.broadcast %cst_12 : f32 to vector<16x1xf32>
    %23 = arith.divf %21, %22 : vector<16x1xf32>
    %24 = vector.broadcast %23 : vector<16x1xf32> to vector<16x16xf32>
    %25 = arith.subf %19, %24 : vector<16x16xf32>
    %26 = vector.broadcast %23 : vector<16x1xf32> to vector<16x16xf32>
    %27 = arith.subf %19, %26 : vector<16x16xf32>
    %28 = arith.mulf %25, %27 : vector<16x16xf32>
    %cst_13 = arith.constant dense<0.000000e+00> : vector<16xf32>
    %29 = vector.multi_reduction <add>, %28, %cst_13 [1] : vector<16x16xf32> to vector<16xf32>
    %30 = vector.shape_cast %29 : vector<16xf32> to vector<16x1xf32>
    %cst_14 = arith.constant 1.600000e+01 : f32
    %31 = vector.broadcast %cst_14 : f32 to vector<16x1xf32>
    %32 = arith.divf %30, %31 : vector<16x1xf32>
    %33 = vector.broadcast %23 : vector<16x1xf32> to vector<16x16xf32>
    %34 = arith.subf %19, %33 : vector<16x16xf32>
    %cst_15 = arith.constant 9.99999974E-6 : f32
    %35 = vector.broadcast %cst_15 : f32 to vector<16x1xf32>
    %36 = arith.addf %32, %35 : vector<16x1xf32>
    %37 = math.rsqrt %36 : vector<16x1xf32>
    %38 = vector.broadcast %37 : vector<16x1xf32> to vector<16x16xf32>
    %39 = arith.mulf %34, %38 : vector<16x16xf32>
    %40 = vector.broadcast %3 : vector<1x16xf32> to vector<16x16xf32>
    %41 = arith.mulf %39, %40 : vector<16x16xf32>
    %42 = vector.broadcast %4 : vector<1x16xf32> to vector<16x16xf32>
    %43 = arith.addf %41, %42 : vector<16x16xf32>
    %cst_16 = arith.constant 0.000000e+00 : f32
    %44 = vector.broadcast %cst_16 : f32 to vector<16x16xf32>
    %45 = arith.cmpf oge, %43, %44 : vector<16x16xf32>
    %cst_17 = arith.constant 5.000000e-02 : f32
    %46 = vector.broadcast %cst_17 : f32 to vector<16x16xf32>
    %47 = arith.mulf %46, %43 : vector<16x16xf32>
    %48 = arith.select %45, %43, %47 : vector<16x16xi1>, vector<16x16xf32>
    %49 = vector.broadcast %5 : vector<1x16xf32> to vector<16x16xf32>
    %50 = arith.mulf %48, %49 : vector<16x16xf32>
    %51 = vector.shape_cast %50 : vector<16x16xf32> to vector<2x8x16xf32>
    %cst_18 = arith.constant dense<0.000000e+00> : vector<2x8xf32>
    %52 = vector.multi_reduction <add>, %51, %cst_18 [2] : vector<2x8x16xf32> to vector<2x8xf32>
    %53 = vector.shape_cast %52 : vector<2x8xf32> to vector<2x8x1xf32>
    %cst_19 = arith.constant dense<0.000000e+00> : vector<2x1xf32>
    %54 = vector.multi_reduction <add>, %53, %cst_19 [1] : vector<2x8x1xf32> to vector<2x1xf32>
    %cst_20 = arith.constant 1.250000e-01 : f32
    %55 = vector.broadcast %cst_20 : f32 to vector<2x1xf32>
    %56 = arith.mulf %54, %55 : vector<2x1xf32>
    %57 = vector.broadcast %6 : vector<1x1xf32> to vector<2x1xf32>
    %58 = arith.addf %56, %57 : vector<2x1xf32>
    %59 = math.absf %58 : vector<2x1xf32>
    %cst_21 = arith.constant 0.000000e+00 : f32
    %60 = vector.broadcast %cst_21 : f32 to vector<2x1xf32>
    %61 = arith.subf %60, %59 : vector<2x1xf32>
    %62 = math.exp %61 : vector<2x1xf32>
    %cst_22 = arith.constant 0.000000e+00 : f32
    %63 = vector.broadcast %cst_22 : f32 to vector<2x1xf32>
    %64 = arith.cmpf oge, %58, %63 : vector<2x1xf32>
    %cst_23 = arith.constant 1.000000e+00 : f32
    %65 = vector.broadcast %cst_23 : f32 to vector<2x1xf32>
    %66 = arith.addf %65, %62 : vector<2x1xf32>
    %cst_24 = arith.constant 1.000000e+00 : f32
    %67 = vector.broadcast %cst_24 : f32 to vector<2x1xf32>
    %68 = arith.divf %67, %66 : vector<2x1xf32>
    %cst_25 = arith.constant 1.000000e+00 : f32
    %69 = vector.broadcast %cst_25 : f32 to vector<2x1xf32>
    %70 = arith.addf %69, %62 : vector<2x1xf32>
    %71 = arith.divf %62, %70 : vector<2x1xf32>
    %72 = arith.select %64, %68, %71 : vector<2x1xi1>, vector<2x1xf32>
    %c0_26 = arith.constant 0 : index
    %c0_27 = arith.constant 0 : index
    %73 = vector.load %arg5[%c0_26, %c0_27] : memref<2x1xf32, #tpu.memory_space<vmem>>, vector<2x1xf32>
    tpu.vector_store %arg5[%c0_26, %c0_27], %72 {strides = array<i32>} : memref<2x1xf32, #tpu.memory_space<vmem>>, vector<2x1xf32>,
    return
  }
}

</mosaic_0001>

<llo_original>
// kernel: cnn_regressor_forward.1
$region0: #{cnn_regressor_forward.1}
  #allocation0 [shape = 'u32[]', space=smem, size = 0x4, offset = 0x4, fixed_abs, tag = 'smem constant byte address 0x4 - core index']
  #allocation1 [shape = 'u32[144,128]{1,0:T(1,128)}', space=vmem, size = 0x12000, scoped, tag = 'internal scratch']
  %s0 = inlined_call_operand.vmem [shape: f32[16,768], index: 0, kind: input, shape index: {}]
  %s1 = inlined_call_operand.vmem [shape: f32[768,32], index: 1, kind: input, shape index: {}]
  %s2 = inlined_call_operand.vmem [shape: f32[32,128], index: 2, kind: input, shape index: {}]
  %s3 = inlined_call_operand.vmem [shape: f32[8,128], index: 3, kind: input, shape index: {}]
  %s4 = inlined_call_operand.vmem [shape: f32[16,128], index: 4, kind: output, shape index: {0}]
  %s5 = inlined_call_operand.vmem [shape: f32[2,1], index: 5, kind: output, shape index: {1}]
  %6 = xla_tuple %s4, %s5
  %s7 = sld [smem:[#allocation0]]
  $region34: #{cnn_regressor_forward.1} parent=0
    _
  %s9 = ssub.s32 1, %s7
  %s10 = scalar_select 0, %s9, %s7
  // Predicated region
  $region2: #{cnn_regressor_forward.1} parent=0 // pred_check
    _
  $region3: #{cnn_regressor_forward.1} parent=0 // pred_check_branch
    %12 = sbr.rel (0) target = $region5
  $region4: #{cnn_regressor_forward.1} parent=0 // pred_region
    _
  $region5: #{cnn_regressor_forward.1} parent=0 // pred_fallthru
    _
  // Predicated region
  $region6: #{cnn_regressor_forward.1} parent=0 // pred_check
    _
  $region7: #{cnn_regressor_forward.1} parent=0 // pred_check_branch
    %14 = sbr.rel (0) target = $region9
  $region8: #{cnn_regressor_forward.1} parent=0 // pred_region
    _
  $region9: #{cnn_regressor_forward.1} parent=0 // pred_fallthru
    _
  // Predicated region
  $region10: #{cnn_regressor_forward.1} parent=0 // pred_check
    _
  $region11: #{cnn_regressor_forward.1} parent=0 // pred_check_branch
    %16 = sbr.rel (0) target = $region13
  $region12: #{cnn_regressor_forward.1} parent=0 // pred_region
    _
  $region13: #{cnn_regressor_forward.1} parent=0 // pred_fallthru
    _
  // Predicated region
  $region14: #{cnn_regressor_forward.1} parent=0 // pred_check
    _
  $region15: #{cnn_regressor_forward.1} parent=0 // pred_check_branch
    %18 = sbr.rel (0) target = $region17
  $region16: #{cnn_regressor_forward.1} parent=0 // pred_region
    _
  $region17: #{cnn_regressor_forward.1} parent=0 // pred_fallthru
    _
  %v19 = vld [vmem:[%s3] sm:$0xff]
  %v20 = vld [vmem:[%s0] sm:$0xff]
  %v21 = vld [vmem:[%s0 + $0x8] sm:$0xff]
  %v22 = vld [vmem:[%s0 + $0x10] sm:$0xff]
  %v23 = vld [vmem:[%s0 + $0x18] sm:$0xff]
  %v24 = vld [vmem:[%s0 + $0x20] sm:$0xff]
  %v25 = vld [vmem:[%s0 + $0x28] sm:$0xff]
  %v26 = vld [vmem:[%s0 + $0x30] sm:$0xff]
  %v27 = vld [vmem:[%s0 + $0x38] sm:$0xff]
  %v28 = vld [vmem:[%s0 + $0x40] sm:$0xff]
  %v29 = vld [vmem:[%s0 + $0x48] sm:$0xff]
  %v30 = vld [vmem:[%s0 + $0x50] sm:$0xff]
  %v31 = vld [vmem:[%s0 + $0x58] sm:$0xff]
  %v32 = vld [vmem:[%s1] sm:$0xff]
  %v33 = vld [vmem:[%s1 + $0x8] sm:$0xff]
  %v34 = vld [vmem:[%s1 + $0x10] sm:$0xff]
  %v35 = vld [vmem:[%s1 + $0x18] sm:$0xff]
  %v36 = vld [vmem:[%s1 + $0x20] sm:$0xff]
  %v37 = vld [vmem:[%s1 + $0x28] sm:$0xff]
  %v38 = vld [vmem:[%s1 + $0x30] sm:$0xff]
  %v39 = vld [vmem:[%s1 + $0x38] sm:$0xff]
  %v40 = vld [vmem:[%s1 + $0x40] sm:$0xff]
  %v41 = vld [vmem:[%s1 + $0x48] sm:$0xff]
  %v42 = vld [vmem:[%s1 + $0x50] sm:$0xff]
  %v43 = vld [vmem:[%s1 + $0x58] sm:$0xff]
  %v44 = vld [vmem:[%s1 + $0x60] sm:$0xff]
  %v45 = vld [vmem:[%s1 + $0x68] sm:$0xff]
  %v46 = vld [vmem:[%s1 + $0x70] sm:$0xff]
  %v47 = vld [vmem:[%s1 + $0x78] sm:$0xff]
  %v48 = vld [vmem:[%s1 + $0x80] sm:$0xff]
  %v49 = vld [vmem:[%s1 + $0x88] sm:$0xff]
  %v50 = vld [vmem:[%s1 + $0x90] sm:$0xff]
  %v51 = vld [vmem:[%s1 + $0x98] sm:$0xff]
  %v52 = vld [vmem:[%s1 + $0xa0] sm:$0xff]
  %v53 = vld [vmem:[%s1 + $0xa8] sm:$0xff]
  %v54 = vld [vmem:[%s1 + $0xb0] sm:$0xff]
  %v55 = vld [vmem:[%s1 + $0xb8] sm:$0xff]
  %v56 = vld [vmem:[%s1 + $0xc0] sm:$0xff]
  %v57 = vld [vmem:[%s1 + $0xc8] sm:$0xff]
  %v58 = vld [vmem:[%s1 + $0xd0] sm:$0xff]
  %v59 = vld [vmem:[%s1 + $0xd8] sm:$0xff]
  %v60 = vld [vmem:[%s1 + $0xe0] sm:$0xff]
  %v61 = vld [vmem:[%s1 + $0xe8] sm:$0xff]
  %v62 = vld [vmem:[%s1 + $0xf0] sm:$0xff]
  %v63 = vld [vmem:[%s1 + $0xf8] sm:$0xff]
  %v64 = vld [vmem:[%s1 + $0x100] sm:$0xff]
  %v65 = vld [vmem:[%s1 + $0x108] sm:$0xff]
  %v66 = vld [vmem:[%s1 + $0x110] sm:$0xff]
  %v67 = vld [vmem:[%s1 + $0x118] sm:$0xff]
  %v68 = vld [vmem:[%s1 + $0x120] sm:$0xff]
  %v69 = vld [vmem:[%s1 + $0x128] sm:$0xff]
  %v70 = vld [vmem:[%s1 + $0x130] sm:$0xff]
  %v71 = vld [vmem:[%s1 + $0x138] sm:$0xff]
  %v72 = vld [vmem:[%s1 + $0x140] sm:$0xff]
  %v73 = vld [vmem:[%s1 + $0x148] sm:$0xff]
  %v74 = vld [vmem:[%s1 + $0x150] sm:$0xff]
  %v75 = vld [vmem:[%s1 + $0x158] sm:$0xff]
  %v76 = vld [vmem:[%s1 + $0x160] sm:$0xff]
  %v77 = vld [vmem:[%s1 + $0x168] sm:$0xff]
  %v78 = vld [vmem:[%s1 + $0x170] sm:$0xff]
  %v79 = vld [vmem:[%s1 + $0x178] sm:$0xff]
  %v80 = vld [vmem:[%s1 + $0x180] sm:$0xff]
  %v81 = vld [vmem:[%s1 + $0x188] sm:$0xff]
  %v82 = vld [vmem:[%s1 + $0x190] sm:$0xff]
  %v83 = vld [vmem:[%s1 + $0x198] sm:$0xff]
  %v84 = vld [vmem:[%s1 + $0x1a0] sm:$0xff]
  %v85 = vld [vmem:[%s1 + $0x1a8] sm:$0xff]
  %v86 = vld [vmem:[%s1 + $0x1b0] sm:$0xff]
  %v87 = vld [vmem:[%s1 + $0x1b8] sm:$0xff]
  %v88 = vld [vmem:[%s1 + $0x1c0] sm:$0xff]
  %v89 = vld [vmem:[%s1 + $0x1c8] sm:$0xff]
  %v90 = vld [vmem:[%s1 + $0x1d0] sm:$0xff]
  %v91 = vld [vmem:[%s1 + $0x1d8] sm:$0xff]
  %v92 = vld [vmem:[%s1 + $0x1e0] sm:$0xff]
  %v93 = vld [vmem:[%s1 + $0x1e8] sm:$0xff]
  %v94 = vld [vmem:[%s1 + $0x1f0] sm:$0xff]
  %v95 = vld [vmem:[%s1 + $0x1f8] sm:$0xff]
  %v96 = vld [vmem:[%s1 + $0x200] sm:$0xff]
  %v97 = vld [vmem:[%s1 + $0x208] sm:$0xff]
  %v98 = vld [vmem:[%s1 + $0x210] sm:$0xff]
  %v99 = vld [vmem:[%s1 + $0x218] sm:$0xff]
  %v100 = vld [vmem:[%s1 + $0x220] sm:$0xff]
  %v101 = vld [vmem:[%s1 + $0x228] sm:$0xff]
  %v102 = vld [vmem:[%s1 + $0x230] sm:$0xff]
  %v103 = vld [vmem:[%s1 + $0x238] sm:$0xff]
  %v104 = vld [vmem:[%s1 + $0x240] sm:$0xff]
  %v105 = vld [vmem:[%s1 + $0x248] sm:$0xff]
  %v106 = vld [vmem:[%s1 + $0x250] sm:$0xff]
  %v107 = vld [vmem:[%s1 + $0x258] sm:$0xff]
  %v108 = vld [vmem:[%s1 + $0x260] sm:$0xff]
  %v109 = vld [vmem:[%s1 + $0x268] sm:$0xff]
  %v110 = vld [vmem:[%s1 + $0x270] sm:$0xff]
  %v111 = vld [vmem:[%s1 + $0x278] sm:$0xff]
  %v112 = vld [vmem:[%s1 + $0x280] sm:$0xff]
  %v113 = vld [vmem:[%s1 + $0x288] sm:$0xff]
  %v114 = vld [vmem:[%s1 + $0x290] sm:$0xff]
  %v115 = vld [vmem:[%s1 + $0x298] sm:$0xff]
  %v116 = vld [vmem:[%s1 + $0x2a0] sm:$0xff]
  %v117 = vld [vmem:[%s1 + $0x2a8] sm:$0xff]
  %v118 = vld [vmem:[%s1 + $0x2b0] sm:$0xff]
  %v119 = vld [vmem:[%s1 + $0x2b8] sm:$0xff]
  %v120 = vld [vmem:[%s1 + $0x2c0] sm:$0xff]
  %v121 = vld [vmem:[%s1 + $0x2c8] sm:$0xff]
  %v122 = vld [vmem:[%s1 + $0x2d0] sm:$0xff]
  %v123 = vld [vmem:[%s1 + $0x2d8] sm:$0xff]
  %v124 = vld [vmem:[%s1 + $0x2e0] sm:$0xff]
  %v125 = vld [vmem:[%s1 + $0x2e8] sm:$0xff]
  %v126 = vld [vmem:[%s1 + $0x2f0] sm:$0xff]
  %v127 = vld [vmem:[%s1 + $0x2f8] sm:$0xff]
  %v128 = vlaneseq
  %v129 = vshrl.u32 %v128, 7
  %v130 = vsub.s32 1, %v129
  %v131 = vrot.slane %v19, %v130
  %132 = vmatprep.subr.mxu0 0.0
  %133 = vmatpush1.msra.mxu0 %v32
  %134 = vmatprep.subr.mxu0 0.0
  %135 = vmatpush1.msra.mxu0 %v33
  %136 = vmatprep.subr.mxu0 0.0
  %137 = vmatpush1.msra.mxu0 %v34
  %138 = vmatprep.subr.mxu0 0.0
  %139 = vmatpush1.msra.mxu0 %v35
  %140 = vmatprep.subr.mxu0 0.0
  %141 = vmatpush1.msra.mxu0 %v36
  %142 = vmatprep.subr.mxu0 0.0
  %143 = vmatpush1.msra.mxu0 %v37
  %144 = vmatprep.subr.mxu0 0.0
  %145 = vmatpush1.msra.mxu0 %v38
  %146 = vmatprep.subr.mxu0 0.0
  %147 = vmatpush1.msra.mxu0 %v39
  %148 = vmatprep.subr.mxu0 0.0
  %149 = vmatpush1.msra.mxu0 %v40
  %150 = vmatprep.subr.mxu0 0.0
  %151 = vmatpush1.msra.mxu0 %v41
  %152 = vmatprep.subr.mxu0 0.0
  %153 = vmatpush1.msra.mxu0 %v42
  %154 = vmatprep.subr.mxu0 0.0
  %155 = vmatpush1.msra.mxu0 %v43
  %156 = vmatprep.subr.mxu0 0.0
  %157 = vmatpush1.msra.mxu0 %v44
  %158 = vmatprep.subr.mxu0 0.0
  %159 = vmatpush1.msra.mxu0 %v45
  %160 = vmatprep.subr.mxu0 0.0
  %161 = vmatpush1.msra.mxu0 %v46
  %162 = vmatprep.subr.mxu0 0.0
  %163 = vmatpush1.msra.mxu0 %v47
  %164 = vmatprep.subr.mxu0 0.0
  %165 = vmatpush1.msra.mxu0 %v48
  %166 = vmatprep.subr.mxu0 0.0
  %167 = vmatpush1.msra.mxu0 %v49
  %168 = vmatprep.subr.mxu0 0.0
  %169 = vmatpush1.msra.mxu0 %v50
  %170 = vmatprep.subr.mxu0 0.0
  %171 = vmatpush1.msra.mxu0 %v51
  %172 = vmatprep.subr.mxu0 0.0
  %173 = vmatpush1.msra.mxu0 %v52
  %174 = vmatprep.subr.mxu0 0.0
  %175 = vmatpush1.msra.mxu0 %v53
  %176 = vmatprep.subr.mxu0 0.0
  %177 = vmatpush1.msra.mxu0 %v54
  %178 = vmatprep.subr.mxu0 0.0
  %179 = vmatpush1.msra.mxu0 %v55
  %180 = vmatprep.subr.mxu0 0.0
  %181 = vmatpush1.msra.mxu0 %v56
  %182 = vmatprep.subr.mxu0 0.0
  %183 = vmatpush1.msra.mxu0 %v57
  %184 = vmatprep.subr.mxu0 0.0
  %185 = vmatpush1.msra.mxu0 %v58
  %186 = vmatprep.subr.mxu0 0.0
  %187 = vmatpush1.msra.mxu0 %v59
  %188 = vmatprep.subr.mxu0 0.0
  %189 = vmatpush1.msra.mxu0 %v60
  %190 = vmatprep.subr.mxu0 0.0
  %191 = vmatpush1.msra.mxu0 %v61
  %192 = vmatprep.subr.mxu0 0.0
  %193 = vmatpush1.msra.mxu0 %v62
  %194 = vmatprep.subr.mxu0 0.0
  %195 = vmatpush1.msra.mxu0 %v63
  %196 = vmatprep.mubr.f32.mxu0 %v21
  %197 = vmatmul.mubr.f32.gmra.mrb[0].mxu0 %v20
  %v198 = vpop.f32.mrb[0].mxu0
  %v199 = vadd.f32 %v131, %v198
  %v200 = vpop.f32.mrb[0].mxu0
  %201 = vmatprep.mubr.f32.mxu0 %v27
  %202 = vmatmul.mubr.f32.gmra.mrb[0].mxu0 %v26
  %v203 = vpop.f32.mrb[0].mxu0
  %v204 = vadd.f32 %v131, %v203
  %v205 = vpop.f32.mrb[0].mxu0
  %206 = vdwg.mxu0
  %207 = vmatprep.subr.mxu0 0.0
  %208 = vmatpush1.msra.mxu0 %v64
  %209 = vmatprep.subr.mxu0 0.0
  %210 = vmatpush1.msra.mxu0 %v65
  %211 = vmatprep.subr.mxu0 0.0
  %212 = vmatpush1.msra.mxu0 %v66
  %213 = vmatprep.subr.mxu0 0.0
  %214 = vmatpush1.msra.mxu0 %v67
  %215 = vmatprep.subr.mxu0 0.0
  %216 = vmatpush1.msra.mxu0 %v68
  %217 = vmatprep.subr.mxu0 0.0
  %218 = vmatpush1.msra.mxu0 %v69
  %219 = vmatprep.subr.mxu0 0.0
  %220 = vmatpush1.msra.mxu0 %v70
  %221 = vmatprep.subr.mxu0 0.0
  %222 = vmatpush1.msra.mxu0 %v71
  %223 = vmatprep.subr.mxu0 0.0
  %224 = vmatpush1.msra.mxu0 %v72
  %225 = vmatprep.subr.mxu0 0.0
  %226 = vmatpush1.msra.mxu0 %v73
  %227 = vmatprep.subr.mxu0 0.0
  %228 = vmatpush1.msra.mxu0 %v74
  %229 = vmatprep.subr.mxu0 0.0
  %230 = vmatpush1.msra.mxu0 %v75
  %231 = vmatprep.subr.mxu0 0.0
  %232 = vmatpush1.msra.mxu0 %v76
  %233 = vmatprep.subr.mxu0 0.0
  %234 = vmatpush1.msra.mxu0 %v77
  %235 = vmatprep.subr.mxu0 0.0
  %236 = vmatpush1.msra.mxu0 %v78
  %237 = vmatprep.subr.mxu0 0.0
  %238 = vmatpush1.msra.mxu0 %v79
  %239 = vmatprep.subr.mxu0 0.0
  %240 = vmatpush1.msra.mxu0 %v80
  %241 = vmatprep.subr.mxu0 0.0
  %242 = vmatpush1.msra.mxu0 %v81
  %243 = vmatprep.subr.mxu0 0.0
  %244 = vmatpush1.msra.mxu0 %v82
  %245 = vmatprep.subr.mxu0 0.0
  %246 = vmatpush1.msra.mxu0 %v83
  %247 = vmatprep.subr.mxu0 0.0
  %248 = vmatpush1.msra.mxu0 %v84
  %249 = vmatprep.subr.mxu0 0.0
  %250 = vmatpush1.msra.mxu0 %v85
  %251 = vmatprep.subr.mxu0 0.0
  %252 = vmatpush1.msra.mxu0 %v86
  %253 = vmatprep.subr.mxu0 0.0
  %254 = vmatpush1.msra.mxu0 %v87
  %255 = vmatprep.subr.mxu0 0.0
  %256 = vmatpush1.msra.mxu0 %v88
  %257 = vmatprep.subr.mxu0 0.0
  %258 = vmatpush1.msra.mxu0 %v89
  %259 = vmatprep.subr.mxu0 0.0
  %260 = vmatpush1.msra.mxu0 %v90
  %261 = vmatprep.subr.mxu0 0.0
  %262 = vmatpush1.msra.mxu0 %v91
  %263 = vmatprep.subr.mxu0 0.0
  %264 = vmatpush1.msra.mxu0 %v92
  %265 = vmatprep.subr.mxu0 0.0
  %266 = vmatpush1.msra.mxu0 %v93
  %267 = vmatprep.subr.mxu0 0.0
  %268 = vmatpush1.msra.mxu0 %v94
  %269 = vmatprep.subr.mxu0 0.0
  %270 = vmatpush1.msra.mxu0 %v95
  %271 = vmatprep.mubr.f32.mxu0 %v23
  %272 = vmatmul.mubr.f32.gmra.mrb[0].mxu0 %v22
  %v273 = vpop.f32.mrb[0].mxu0
  %v274 = vadd.f32 %v199, %v273
  %v275 = vpop.f32.mrb[0].mxu0
  %276 = vmatprep.mubr.f32.mxu0 %v29
  %277 = vmatmul.mubr.f32.gmra.mrb[0].mxu0 %v28
  %v278 = vpop.f32.mrb[0].mxu0
  %v279 = vadd.f32 %v204, %v278
  %v280 = vpop.f32.mrb[0].mxu0
  %281 = vdwg.mxu0
  %282 = vmatprep.subr.mxu0 0.0
  %283 = vmatpush1.msra.mxu0 %v96
  %284 = vmatprep.subr.mxu0 0.0
  %285 = vmatpush1.msra.mxu0 %v97
  %286 = vmatprep.subr.mxu0 0.0
  %287 = vmatpush1.msra.mxu0 %v98
  %288 = vmatprep.subr.mxu0 0.0
  %289 = vmatpush1.msra.mxu0 %v99
  %290 = vmatprep.subr.mxu0 0.0
  %291 = vmatpush1.msra.mxu0 %v100
  %292 = vmatprep.subr.mxu0 0.0
  %293 = vmatpush1.msra.mxu0 %v101
  %294 = vmatprep.subr.mxu0 0.0
  %295 = vmatpush1.msra.mxu0 %v102
  %296 = vmatprep.subr.mxu0 0.0
  %297 = vmatpush1.msra.mxu0 %v103
  %298 = vmatprep.subr.mxu0 0.0
  %299 = vmatpush1.msra.mxu0 %v104
  %300 = vmatprep.subr.mxu0 0.0
  %301 = vmatpush1.msra.mxu0 %v105
  %302 = vmatprep.subr.mxu0 0.0
  %303 = vmatpush1.msra.mxu0 %v106
  %304 = vmatprep.subr.mxu0 0.0
  %305 = vmatpush1.msra.mxu0 %v107
  %306 = vmatprep.subr.mxu0 0.0
  %307 = vmatpush1.msra.mxu0 %v108
  %308 = vmatprep.subr.mxu0 0.0
  %309 = vmatpush1.msra.mxu0 %v109
  %310 = vmatprep.subr.mxu0 0.0
  %311 = vmatpush1.msra.mxu0 %v110
  %312 = vmatprep.subr.mxu0 0.0
  %313 = vmatpush1.msra.mxu0 %v111
  %314 = vmatprep.subr.mxu0 0.0
  %315 = vmatpush1.msra.mxu0 %v112
  %316 = vmatprep.subr.mxu0 0.0
  %317 = vmatpush1.msra.mxu0 %v113
  %318 = vmatprep.subr.mxu0 0.0
  %319 = vmatpush1.msra.mxu0 %v114
  %320 = vmatprep.subr.mxu0 0.0
  %321 = vmatpush1.msra.mxu0 %v115
  %322 = vmatprep.subr.mxu0 0.0
  %323 = vmatpush1.msra.mxu0 %v116
  %324 = vmatprep.subr.mxu0 0.0
  %325 = vmatpush1.msra.mxu0 %v117
  %326 = vmatprep.subr.mxu0 0.0
  %327 = vmatpush1.msra.mxu0 %v118
  %328 = vmatprep.subr.mxu0 0.0
  %329 = vmatpush1.msra.mxu0 %v119
  %330 = vmatprep.subr.mxu0 0.0
  %331 = vmatpush1.msra.mxu0 %v120
  %332 = vmatprep.subr.mxu0 0.0
  %333 = vmatpush1.msra.mxu0 %v121
  %334 = vmatprep.subr.mxu0 0.0
  %335 = vmatpush1.msra.mxu0 %v122
  %336 = vmatprep.subr.mxu0 0.0
  %337 = vmatpush1.msra.mxu0 %v123
  %338 = vmatprep.subr.mxu0 0.0
  %339 = vmatpush1.msra.mxu0 %v124
  %340 = vmatprep.subr.mxu0 0.0
  %341 = vmatpush1.msra.mxu0 %v125
  %342 = vmatprep.subr.mxu0 0.0
  %343 = vmatpush1.msra.mxu0 %v126
  %344 = vmatprep.subr.mxu0 0.0
  %345 = vmatpush1.msra.mxu0 %v127
  %346 = vmatprep.mubr.f32.mxu0 %v25
  %347 = vmatmul.mubr.f32.gmra.mrb[0].mxu0 %v24
  %v348 = vpop.f32.mrb[0].mxu0
  %v349 = vadd.f32 %v274, %v348
  %v350 = vpop.f32.mrb[0].mxu0
  %351 = vmatprep.mubr.f32.mxu0 %v31
  %352 = vmatmul.mubr.f32.gmra.mrb[0].mxu0 %v30
  %v353 = vpop.f32.mrb[0].mxu0
  %v354 = vadd.f32 %v279, %v353
  %v355 = vpop.f32.mrb[0].mxu0
  %356 = vdwg.mxu0
  %v357 = vmax.f32 %v349, 0.0
  %v358 = vmax.f32 %v354, 0.0
  %v359 = vld [vmem:[%s2] sm:$0xff]
  %v360 = vld [vmem:[%s2 + $0x8] sm:$0xff]
  %v361 = vld [vmem:[%s2 + $0x10] sm:$0xff]
  %v362 = vld [vmem:[%s2 + $0x18] sm:$0xff]
  %v363 = vlaneseq
  %v364 = vshrl.u32 %v363, 7
  %v365 = vsub.s32 0, %v364
  %v366 = vrot.slane %v19, %v365
  %vm367 = vcmask 261120
  %v369 = vsel %vm367, %v357, 0
  %v372 = vsel %vm367, %v358, 0
  %374 = vmatprep.subr.mxu0 0.0
  %375 = vmatpush1.msra.mxu0 %v359
  %376 = vmatprep.subr.mxu0 0.0
  %377 = vmatpush1.msra.mxu0 %v360
  %378 = vmatprep.subr.mxu0 0.0
  %379 = vmatpush1.msra.mxu0 %v361
  %380 = vmatprep.subr.mxu0 0.0
  %381 = vmatpush1.msra.mxu0 %v362
  %382 = vmatprep.subr.mxu0 0.0
  %383 = vmatpush1.msra.mxu0 0.0
  %384 = vmatprep.subr.mxu0 0.0
  %385 = vmatpush1.msra.mxu0 0.0
  %386 = vmatprep.subr.mxu0 0.0
  %387 = vmatpush1.msra.mxu0 0.0
  %388 = vmatprep.subr.mxu0 0.0
  %389 = vmatpush1.msra.mxu0 0.0
  %390 = vmatprep.subr.mxu0 0.0
  %391 = vmatpush1.msra.mxu0 0.0
  %392 = vmatprep.subr.mxu0 0.0
  %393 = vmatpush1.msra.mxu0 0.0
  %394 = vmatprep.subr.mxu0 0.0
  %395 = vmatpush1.msra.mxu0 0.0
  %396 = vmatprep.subr.mxu0 0.0
  %397 = vmatpush1.msra.mxu0 0.0
  %398 = vmatprep.subr.mxu0 0.0
  %399 = vmatpush1.msra.mxu0 0.0
  %400 = vmatprep.subr.mxu0 0.0
  %401 = vmatpush1.msra.mxu0 0.0
  %402 = vmatprep.subr.mxu0 0.0
  %403 = vmatpush1.msra.mxu0 0.0
  %404 = vmatprep.subr.mxu0 0.0
  %405 = vmatpush1.msra.mxu0 0.0
  %406 = vmatprep.subr.mxu0 0.0
  %407 = vmatpush1.msra.mxu0 0.0
  %408 = vmatprep.subr.mxu0 0.0
  %409 = vmatpush1.msra.mxu0 0.0
  %410 = vmatprep.subr.mxu0 0.0
  %411 = vmatpush1.msra.mxu0 0.0
  %412 = vmatprep.subr.mxu0 0.0
  %413 = vmatpush1.msra.mxu0 0.0
  %414 = vmatprep.subr.mxu0 0.0
  %415 = vmatpush1.msra.mxu0 0.0
  %416 = vmatprep.subr.mxu0 0.0
  %417 = vmatpush1.msra.mxu0 0.0
  %418 = vmatprep.subr.mxu0 0.0
  %419 = vmatpush1.msra.mxu0 0.0
  %420 = vmatprep.subr.mxu0 0.0
  %421 = vmatpush1.msra.mxu0 0.0
  %422 = vmatprep.subr.mxu0 0.0
  %423 = vmatpush1.msra.mxu0 0.0
  %424 = vmatprep.subr.mxu0 0.0
  %425 = vmatpush1.msra.mxu0 0.0
  %426 = vmatprep.subr.mxu0 0.0
  %427 = vmatpush1.msra.mxu0 0.0
  %428 = vmatprep.subr.mxu0 0.0
  %429 = vmatpush1.msra.mxu0 0.0
  %430 = vmatprep.subr.mxu0 0.0
  %431 = vmatpush1.msra.mxu0 0.0
  %432 = vmatprep.subr.mxu0 0.0
  %433 = vmatpush1.msra.mxu0 0.0
  %434 = vmatprep.subr.mxu0 0.0
  %435 = vmatpush1.msra.mxu0 0.0
  %436 = vmatprep.subr.mxu0 0.0
  %437 = vmatpush1.msra.mxu0 0.0
  %438 = vmatprep.mubr.f32.mxu0 0.0
  %439 = vmatmul.mubr.f32.gmra.mrb[0].mxu0 %v369
  %v440 = vpop.f32.mrb[0].mxu0
  %v441 = vadd.f32 %v366, %v440
  %v442 = vpop.f32.mrb[0].mxu0
  %443 = vmatprep.mubr.f32.mxu0 0.0
  %444 = vmatmul.mubr.f32.gmra.mrb[0].mxu0 %v372
  %v445 = vpop.f32.mrb[0].mxu0
  %v446 = vadd.f32 %v366, %v445
  %v447 = vpop.f32.mrb[0].mxu0
  %448 = vdwg.mxu0
  %449 = vst [vmem:[%s4] sm:$0xff] %v441
  %450 = vst [vmem:[%s4 + $0x8] sm:$0xff] %v446
  %453 = vrot.lane.b32.xlu0 %v441, 48
  %v454 = vpop.permute.xlu0 %453
  %455 = vrot.lane.b32.xlu0 %v446, 48
  %v456 = vpop.permute.xlu0 %455
  %vm459 = vcmask 130048
  %v460 = vsel %vm459, %v454, 0.0
  %461 = vadd.xlane.f32.xlu0 %v460
  %v462 = vpop.xlane.xlu0 %461
  %v463 = vsel %vm459, %v456, 0.0
  %464 = vadd.xlane.f32.xlu0 %v463
  %v465 = vpop.xlane.xlu0 %464
  %v466 = vrcp.pop 16.0
  %v467 = vmul.f32 %v462, %v466
  %v468 = vmul.f32 %v465, %v466
  %v469 = vsub.f32 %v441, %v467
  %v470 = vsub.f32 %v446, %v468
  %v471 = vmul.f32 %v469, %v469
  %v472 = vmul.f32 %v470, %v470
  %475 = vrot.lane.b32.xlu0 %v471, 48
  %v476 = vpop.permute.xlu0 %475
  %477 = vrot.lane.b32.xlu0 %v472, 48
  %v478 = vpop.permute.xlu0 %477
  %v481 = vsel %vm459, %v476, 0.0
  %482 = vadd.xlane.f32.xlu0 %v481
  %v483 = vpop.xlane.xlu0 %482
  %v484 = vsel %vm459, %v478, 0.0
  %485 = vadd.xlane.f32.xlu0 %v484
  %v486 = vpop.xlane.xlu0 %485
  %v487 = vmul.f32 %v483, %v466
  %v488 = vmul.f32 %v486, %v466
  %v489 = vadd.f32 %v487, 1e-05
  %v490 = vadd.f32 %v488, 1e-05
  %v491 = vrsqrt.pop %v489
  %v492 = vrsqrt.pop %v490
  %v493 = vmul.f32 %v469, %v491
  %v494 = vmul.f32 %v470, %v492
  %v495 = vlaneseq
  %v496 = vshrl.u32 %v495, 7
  %v497 = vsub.s32 2, %v496
  %v498 = vrot.slane %v19, %v497
  %500 = vrot.lane.b32.xlu0 %v498, 80
  %v501 = vpop.permute.xlu0 %500
  %v503 = vmul.f32 %v493, %v501
  %v504 = vmul.f32 %v494, %v501
  %v505 = vlaneseq
  %v506 = vshrl.u32 %v505, 7
  %v507 = vsub.s32 3, %v506
  %v508 = vrot.slane %v19, %v507
  %510 = vrot.lane.b32.xlu0 %v508, 80
  %v511 = vpop.permute.xlu0 %510
  %v513 = vadd.f32 %v503, %v511
  %v514 = vadd.f32 %v504, %v511
  %vm515 = vcmp.ge.f32.partialorder %v513, 0.0
  %vm516 = vcmp.ge.f32.partialorder %v514, 0.0
  %v517 = vmul.f32 %v513, 0.05
  %v518 = vmul.f32 %v514, 0.05
  %v519 = vsel %vm515, %v513, %v517
  %v520 = vsel %vm516, %v514, %v518
  %v521 = vlaneseq
  %v522 = vshrl.u32 %v521, 7
  %v523 = vsub.s32 4, %v522
  %v524 = vrot.slane %v19, %v523
  %526 = vrot.lane.b32.xlu0 %v524, 80
  %v527 = vpop.permute.xlu0 %526
  %v529 = vmul.f32 %v519, %v527
  %v530 = vmul.f32 %v520, %v527
  %533 = vrot.lane.b32.xlu0 %v529, 48
  %v534 = vpop.permute.xlu0 %533
  %535 = vrot.lane.b32.xlu0 %v530, 48
  %v536 = vpop.permute.xlu0 %535
  %v539 = vsel %vm459, %v534, 0.0
  %540 = vadd.xlane.f32.xlu0 %v539
  %v541 = vpop.xlane.xlu0 %540
  %v542 = vsel %vm459, %v536, 0.0
  %543 = vadd.xlane.f32.xlu0 %v542
  %v544 = vpop.xlane.xlu0 %543
  %v545 = vrot.slane %v541, 4
  %v546 = vadd.f32 %v541, %v545
  %v547 = vrot.slane %v546, 2
  %v548 = vadd.f32 %v546, %v547
  %v549 = vrot.slane %v548, 1
  %v550 = vadd.f32 %v548, %v549
  %v551 = vrot.slane %v544, 4
  %v552 = vadd.f32 %v544, %v551
  %v553 = vrot.slane %v552, 2
  %v554 = vadd.f32 %v552, %v553
  %v555 = vrot.slane %v554, 1
  %v556 = vadd.f32 %v554, %v555
  %v557 = vmul.f32 %v550, 0.125
  %v558 = vmul.f32 %v556, 0.125
  %v559 = vlaneseq
  %v560 = vshrl.u32 %v559, 7
  %v561 = vsub.s32 5, %v560
  %v562 = vrot.slane %v19, %v561
  %v563 = vadd.f32 %v557, %v562
  %v564 = vadd.f32 %v558, %v562
  %v565 = vand.u32 2147483647, %v563
  %v566 = vand.u32 2147483647, %v564
  %v567 = vsub.f32 0.0, %v565
  %v568 = vsub.f32 0.0, %v566
  %v569 = vmul.f32 %v567, 1.442695
  %v570 = vpow.pop %v569
  %v571 = vmul.f32 %v568, 1.442695
  %v572 = vpow.pop %v571
  %vm573 = vcmp.ge.f32.partialorder %v563, 0.0
  %vm574 = vcmp.ge.f32.partialorder %v564, 0.0
  %v575 = vadd.f32 %v570, 1.0
  %v576 = vadd.f32 %v572, 1.0
  %v577 = vrcp.pop %v575
  %v578 = vmul.f32 1.0, %v577
  %v579 = vrcp.pop %v576
  %v580 = vmul.f32 1.0, %v579
  %v581 = vmul.f32 %v570, %v577
  %v582 = vmul.f32 %v572, %v579
  %v583 = vsel %vm573, %v578, %v581
  %v584 = vsel %vm574, %v580, %v582
  %v587 = vrot.slane %v584, 7
  %vm588 = vcmask 1041409
  %v589 = vsel %vm588, %v587, %v583
  %vm591 = vcmask 1024
  %592 = vst.msk [vmem:[%s5] sm:$0x3] %vm591, %v589
  // Predicated region
  $region18: #{cnn_regressor_forward.1} parent=0 // pred_check
    _
  $region19: #{cnn_regressor_forward.1} parent=0 // pred_check_branch
    %594 = sbr.rel (0) target = $region21
  $region20: #{cnn_regressor_forward.1} parent=0 // pred_region
    _
  $region21: #{cnn_regressor_forward.1} parent=0 // pred_fallthru
    _
  // Predicated region
  $region22: #{cnn_regressor_forward.1} parent=0 // pred_check
    _
  $region23: #{cnn_regressor_forward.1} parent=0 // pred_check_branch
    %596 = sbr.rel (0) target = $region25
  $region24: #{cnn_regressor_forward.1} parent=0 // pred_region
    _
  $region25: #{cnn_regressor_forward.1} parent=0 // pred_fallthru
    _
  // Predicated region
  $region26: #{cnn_regressor_forward.1} parent=0 // pred_check
    _
  $region27: #{cnn_regressor_forward.1} parent=0 // pred_check_branch
    %598 = sbr.rel (0) target = $region29
  $region28: #{cnn_regressor_forward.1} parent=0 // pred_region
    _
  $region29: #{cnn_regressor_forward.1} parent=0 // pred_fallthru
    _
  // Predicated region
  $region30: #{cnn_regressor_forward.1} parent=0 // pred_check
    _
  $region31: #{cnn_regressor_forward.1} parent=0 // pred_check_branch
    %600 = sbr.rel (0) target = $region33
  $region32: #{cnn_regressor_forward.1} parent=0 // pred_region
    _
  $region33: #{cnn_regressor_forward.1} parent=0 // pred_fallthru
    _

</llo_original>
